<compile_context>
chip_gen: v5e
topology: v5e:2x2
jax: 0.10.0
libtpu: 0.0.40
codegen_flags: <defaults>
</compile_context>

<pallas_src>
import math
from functools import partial

import jax
import jax.numpy as jnp
from jax.experimental import pallas as pl
from jax.experimental.pallas import tpu as pltpu


def _round_up(x, m):
    return ((x + m - 1) // m) * m


# ---------------------------------------------------------------------------
# Pass 1: fused QKV projection.
# ---------------------------------------------------------------------------
def _qkv_proj_kernel(x_ref, w_ref, q_ref, k_ref, v_ref, *, d_out_p):
    # x_ref / w_ref are already bf16 (materialized once in the wrapper), and
    # the 1/sqrt(d_out) scale is folded into the Q columns of w, so this is a
    # single wide MXU matmul plus three lane-dense stores.
    proj = jnp.dot(x_ref[...], w_ref[...],
                   preferred_element_type=jnp.float32)        # (t1, 3*d_out_p)
    q_ref[...] = proj[:, :d_out_p].astype(q_ref.dtype)
    k_ref[...] = proj[:, d_out_p:2 * d_out_p].astype(k_ref.dtype)
    v_ref[...] = proj[:, 2 * d_out_p:].astype(v_ref.dtype)


# ---------------------------------------------------------------------------
# Pass 2a: attention with K/V fully resident in VMEM (1-D grid over q tiles).
# ---------------------------------------------------------------------------
def _attn_resident_kernel(q_ref, k_ref, v_ref, o_ref, *, seq_len, padded):
    q = q_ref[...]                                   # (tq, D) bf16, pre-scaled
    k = k_ref[...]                                   # (s_p, D) bf16, resident
    # Contract over the last axis of both operands: feeds the MXU with the
    # (s_p, D) layout directly, no k.T transpose/copy is materialized.
    s = jax.lax.dot_general(q, k, dimension_numbers=(((1,), (1,)), ((), ())),
                            preferred_element_type=jnp.float32)  # (tq, s_p)
    if padded:
        col = jax.lax.broadcasted_iota(jnp.int32, s.shape, 1)
        s = jnp.where(col < seq_len, s, -1e30)
    m = jnp.max(s, axis=-1, keepdims=True)
    p = jnp.exp(s - m)
    l = jnp.sum(p, axis=-1, keepdims=True)
    o = jnp.dot(p.astype(v_ref.dtype), v_ref[...],
                preferred_element_type=jnp.float32)
    o_ref[...] = (o * pl.reciprocal(l, approx=True)).astype(o_ref.dtype)


# ---------------------------------------------------------------------------
# Pass 2b: flash-style fallback (online softmax) for very long sequences.
# Output block is resident across the kv axis and used as the accumulator.
# ---------------------------------------------------------------------------
def _flash_attn_kernel(q_ref, k_ref, v_ref, o_ref, m_sc, l_sc, *,
                       seq_len, tk, padded):
    ki = pl.program_id(1)

    @pl.when(ki == 0)
    def _():
        m_sc[...] = jnp.full_like(m_sc, -jnp.inf)
        l_sc[...] = jnp.zeros_like(l_sc)
        o_ref[...] = jnp.zeros_like(o_ref)

    s = jax.lax.dot_general(q_ref[...], k_ref[...],
                            dimension_numbers=(((1,), (1,)), ((), ())),
                            preferred_element_type=jnp.float32)  # (tq, tk)
    if padded:  # guard fixed: based on s_p > seq, not seq % tk
        col = ki * tk + jax.lax.broadcasted_iota(jnp.int32, s.shape, 1)
        s = jnp.where(col < seq_len, s, -1e30)

    m_prev = m_sc[...]
    m_new = jnp.maximum(m_prev, jnp.max(s, axis=-1, keepdims=True))
    alpha = jnp.exp(m_prev - m_new)
    p = jnp.exp(s - m_new)
    l_sc[...] = alpha * l_sc[...] + jnp.sum(p, axis=-1, keepdims=True)
    o_ref[...] = alpha * o_ref[...] + jnp.dot(
        p.astype(v_ref.dtype), v_ref[...], preferred_element_type=jnp.float32)
    m_sc[...] = m_new

    @pl.when(ki == pl.num_programs(1) - 1)
    def _():
        o_ref[...] = o_ref[...] * pl.reciprocal(l_sc[...], approx=True)


# ---------------------------------------------------------------------------
# Wrapper
# ---------------------------------------------------------------------------
def self_attention_v2(x, wq_t, wk_t, wv_t, *, tq=256, tk=256, row_tile=512,
                      kv_resident_budget=24 << 20, force_flash=False):
    """x: (seq, d_in) f32; w*_t: (d_in, d_out) (torch Linear weight transposed)."""
    seq, d_in = x.shape
    d_out = wq_t.shape[1]
    scale = 1.0 / math.sqrt(d_out)                   # keys.shape[-1] ** 0.5

    # Lane-dense head dim.
    # TODO(synk): for very small d_out the 128-pad inflates the Q/K/V
    # intermediates ~8x; a full-extent (= d_out) last dim is the alternative.
    d_out_p = _round_up(d_out, 128)

    if seq <= tq:
        # Tiny sequence: a single q tile covering the whole (8-aligned) seq.
        tq_eff = _round_up(seq, 8)
        s_p = tq_eff
        small = True
    else:
        tq_eff = tq
        s_p = _round_up(seq, math.lcm(tq, tk))       # divisible by both tiles
        small = False

    padded = s_p > seq

    # bf16 inputs materialized once here: halves pass-1 HBM traffic and
    # removes the per-grid-step f32->bf16 cast of the resident weight block.
    x_p = jnp.pad(x, ((0, s_p - seq), (0, 0))).astype(jnp.bfloat16)

    def pad_w(w):
        return jnp.pad(w, ((0, 0), (0, d_out_p - d_out)))

    # Fold 1/sqrt(d_out) into the Q weight columns (O(d_in*d_out), done once)
    # so neither pass needs any extra scaling.
    wqkv = jnp.concatenate(
        [pad_w(wq_t * scale), pad_w(wk_t), pad_w(wv_t)], axis=1
    ).astype(jnp.bfloat16)

    # ---- Pass 1: fused QKV projection -> bf16 Q (pre-scaled), K, V ---------
    t1 = min(tq_eff, s_p)
    while t1 * 2 <= row_tile and s_p % (t1 * 2) == 0:
        t1 *= 2                                      # grow toward 512-row tiles

    vmem1 = (2 * t1 * d_in * 2                       # x tile, bf16, double-buffered
             + 2 * d_in * 3 * d_out_p * 2            # weight block (conservative x2)
             + 3 * 2 * t1 * d_out_p * 2              # q/k/v out tiles, double-buffered
             + 3 * t1 * d_out_p * 4)                 # f32 matmul result + slices
    vmem1 = min(max(2 * vmem1, 8 << 20), 64 << 20)   # fits v7x's 64 MiB too

    qkv_shape = jax.ShapeDtypeStruct((s_p, d_out_p), jnp.bfloat16)
    q, k, v = pl.pallas_call(
        partial(_qkv_proj_kernel, d_out_p=d_out_p),
        out_shape=(qkv_shape, qkv_shape, qkv_shape),
        grid_spec=pltpu.PrefetchScalarGridSpec(
            num_scalar_prefetch=0,
            grid=(s_p // t1,),
            in_specs=[
                pl.BlockSpec((t1, d_in), lambda i: (i, 0)),
                pl.BlockSpec((d_in, 3 * d_out_p), lambda i: (0, 0)),
            ],
            out_specs=[
                pl.BlockSpec((t1, d_out_p), lambda i: (i, 0)),
                pl.BlockSpec((t1, d_out_p), lambda i: (i, 0)),
                pl.BlockSpec((t1, d_out_p), lambda i: (i, 0)),
            ],
        ),
        compiler_params=pltpu.CompilerParams(
            dimension_semantics=("parallel",),
            vmem_limit_bytes=vmem1),
    )(x_p, wqkv)

    # ---- Pass 2: attention ---------------------------------------------------
    resident_bytes = (2 * 2 * s_p * d_out_p * 2      # K + V bf16 (x2 pipeline bufs)
                      + 2 * 2 * tq_eff * d_out_p * 2  # Q tile, bf16, double-buffered
                      + 2 * 2 * tq_eff * d_out_p * 4  # out tile, f32, double-buffered
                      + 3 * tq_eff * s_p * 4)         # f32 score / p / temporaries
    use_resident = small or ((not force_flash)
                             and resident_bytes <= kv_resident_budget)

    if use_resident:
        vmem2 = min(max(2 * resident_bytes, 8 << 20), 64 << 20)
        out_p = pl.pallas_call(
            partial(_attn_resident_kernel, seq_len=seq, padded=padded),
            out_shape=jax.ShapeDtypeStruct((s_p, d_out_p), jnp.float32),
            grid_spec=pltpu.PrefetchScalarGridSpec(
                num_scalar_prefetch=0,
                grid=(s_p // tq_eff,),
                in_specs=[
                    pl.BlockSpec((tq_eff, d_out_p), lambda i: (i, 0)),  # Q tile
                    pl.BlockSpec((s_p, d_out_p), lambda i: (0, 0)),     # K resident
                    pl.BlockSpec((s_p, d_out_p), lambda i: (0, 0)),     # V resident
                ],
                out_specs=pl.BlockSpec((tq_eff, d_out_p), lambda i: (i, 0)),
            ),
            compiler_params=pltpu.CompilerParams(
                dimension_semantics=("parallel",),
                vmem_limit_bytes=vmem2),
        )(q, k, v)
    else:
        flash_bytes = (2 * tq_eff * d_out_p * 2       # Q tile, bf16, double-buffered
                       + 2 * 2 * tk * d_out_p * 2     # K + V tiles, double-buffered
                       + 2 * tq_eff * d_out_p * 4     # out/accumulator tile, f32
                       + 3 * tq_eff * tk * 4          # score / p / temporaries
                       + 2 * tq_eff * 4               # m, l scratch
                       + tq_eff * d_out_p * 4)
        vmem2 = min(max(2 * flash_bytes, 8 << 20), 64 << 20)
        out_p = pl.pallas_call(
            partial(_flash_attn_kernel, seq_len=seq, tk=tk, padded=padded),
            out_shape=jax.ShapeDtypeStruct((s_p, d_out_p), jnp.float32),
            grid_spec=pltpu.PrefetchScalarGridSpec(
                num_scalar_prefetch=0,
                grid=(s_p // tq_eff, s_p // tk),
                in_specs=[
                    pl.BlockSpec((tq_eff, d_out_p), lambda qi, ki: (qi, 0)),  # Q
                    pl.BlockSpec((tk, d_out_p), lambda qi, ki: (ki, 0)),      # K
                    pl.BlockSpec((tk, d_out_p), lambda qi, ki: (ki, 0)),      # V
                ],
                out_specs=pl.BlockSpec((tq_eff, d_out_p), lambda qi, ki: (qi, 0)),
                scratch_shapes=[
                    pltpu.VMEM((tq_eff, 1), jnp.float32),   # running max m
                    pltpu.VMEM((tq_eff, 1), jnp.float32),   # running sum l
                ],
            ),
            compiler_params=pltpu.CompilerParams(
                dimension_semantics=("parallel", "arbitrary"),
                vmem_limit_bytes=vmem2),
        )(q, k, v)

    return out_p[:seq, :d_out]


def _reference(x, wq_t, wk_t, wv_t):
    q = x @ wq_t
    k = x @ wk_t
    v = x @ wv_t
    scores = q @ k.T / math.sqrt(k.shape[-1])
    w = jax.nn.softmax(scores, axis=-1)
    return w @ v


if __name__ == "__main__":
    seq, d_in, d_out = 8, 32, 16

    key = jax.random.PRNGKey(0)
    kx, kq, kk, kv_ = jax.random.split(key, 4)

    x = jax.random.normal(kx, (seq, d_in), dtype=jnp.float32)
    # torch.nn.Linear weight is (d_out, d_in); pass transposed (d_in, d_out).
    # qkv_bias=False -> no biases.
    wq_t = jax.random.normal(kq, (d_in, d_out), dtype=jnp.float32) * (1.0 / math.sqrt(d_in))
    wk_t = jax.random.normal(kk, (d_in, d_out), dtype=jnp.float32) * (1.0 / math.sqrt(d_in))
    wv_t = jax.random.normal(kv_, (d_in, d_out), dtype=jnp.float32) * (1.0 / math.sqrt(d_in))

    # Main check (small shape, resident-K/V path).
    out = jax.block_until_ready(self_attention_v2(x, wq_t, wk_t, wv_t))
    ref = _reference(x, wq_t, wk_t, wv_t)
    assert out.shape == (seq, d_out)
    max_err = float(jnp.max(jnp.abs(out - ref)))
    # bf16 MXU inputs + EUP approx reciprocal -> loosen the pure-f32 tolerance.
    assert jnp.allclose(out, ref, atol=5e-2, rtol=5e-2), \
        f"mismatch vs reference (max abs err {max_err})"

    # Also exercise the flash fallback with padded keys (covers the fixed
    # s_p > seq mask guard and the o_ref-as-accumulator path).
    seq2 = 200
    x2 = jax.random.normal(jax.random.PRNGKey(1), (seq2, d_in), dtype=jnp.float32)
    out2 = jax.block_until_ready(
        self_attention_v2(x2, wq_t, wk_t, wv_t, tq=128, tk=128, force_flash=True))
    ref2 = _reference(x2, wq_t, wk_t, wv_t)
    assert out2.shape == (seq2, d_out)
    max_err2 = float(jnp.max(jnp.abs(out2 - ref2)))
    assert jnp.allclose(out2, ref2, atol=5e-2, rtol=5e-2), \
        f"flash-path mismatch vs reference (max abs err {max_err2})"

    print("KERNEL_OK")
</pallas_src>

<mosaic_0001>
module attributes {stable_mosaic.version = 11 : i64} {
  func.func @_qkv_proj_kernel(%arg0: i32, %arg1: memref<8x32xbf16, #tpu.memory_space<vmem>>, %arg2: memref<32x384xbf16, #tpu.memory_space<vmem>>, %arg3: memref<8x128xbf16, #tpu.memory_space<vmem>>, %arg4: memref<8x128xbf16, #tpu.memory_space<vmem>>, %arg5: memref<8x128xbf16, #tpu.memory_space<vmem>>) attributes {dimension_semantics = [#tpu.dimension_semantics<parallel>], iteration_bounds = array<i64: 1>, scalar_prefetch = 0 : i64, scratch_operands = 0 : i64, tpu.core_type = #tpu.core_type<tc>, window_params = [{transform_indices = @transform_0, window_bounds = array<i64: 8, 32>}, {pipeline_mode = #tpu.pipeline_mode<synchronous>, transform_indices = @transform_1, window_bounds = array<i64: 32, 384>}, {transform_indices = @transform_2, window_bounds = array<i64: 8, 128>}, {transform_indices = @transform_3, window_bounds = array<i64: 8, 128>}, {transform_indices = @transform_4, window_bounds = array<i64: 8, 128>}]} {
    %c0 = arith.constant 0 : index
    %c0_0 = arith.constant 0 : index
    %0 = vector.load %arg1[%c0, %c0_0] : memref<8x32xbf16, #tpu.memory_space<vmem>>, vector<8x32xbf16>
    %c0_1 = arith.constant 0 : index
    %c0_2 = arith.constant 0 : index
    %1 = vector.load %arg2[%c0_1, %c0_2] : memref<32x384xbf16, #tpu.memory_space<vmem>>, vector<32x384xbf16>
    %cst = arith.constant dense<0.000000e+00> : vector<8x384xf32>
    %2 = tpu.matmul %0, %1, %cst {dimension_numbers = #tpu.dot_dimension_numbers<[1], [0], [0], [1], [0, 0, 1, 1], [], []>} : vector<8x32xbf16>, vector<32x384xbf16>, vector<8x384xf32> -> vector<8x384xf32>
    %3 = vector.extract_strided_slice %2 {offsets = [0, 0], sizes = [8, 128], strides = [1, 1]} : vector<8x384xf32> to vector<8x128xf32>
    %4 = arith.truncf %3 : vector<8x128xf32> to vector<8x128xbf16>
    %c0_3 = arith.constant 0 : index
    %c0_4 = arith.constant 0 : index
    %5 = vector.load %arg3[%c0_3, %c0_4] : memref<8x128xbf16, #tpu.memory_space<vmem>>, vector<8x128xbf16>
    tpu.vector_store %arg3[%c0_3, %c0_4], %4 {strides = array<i32>} : memref<8x128xbf16, #tpu.memory_space<vmem>>, vector<8x128xbf16>,
    %6 = vector.extract_strided_slice %2 {offsets = [0, 128], sizes = [8, 128], strides = [1, 1]} : vector<8x384xf32> to vector<8x128xf32>
    %7 = arith.truncf %6 : vector<8x128xf32> to vector<8x128xbf16>
    %c0_5 = arith.constant 0 : index
    %c0_6 = arith.constant 0 : index
    %8 = vector.load %arg4[%c0_5, %c0_6] : memref<8x128xbf16, #tpu.memory_space<vmem>>, vector<8x128xbf16>
    tpu.vector_store %arg4[%c0_5, %c0_6], %7 {strides = array<i32>} : memref<8x128xbf16, #tpu.memory_space<vmem>>, vector<8x128xbf16>,
    %9 = vector.extract_strided_slice %2 {offsets = [0, 256], sizes = [8, 128], strides = [1, 1]} : vector<8x384xf32> to vector<8x128xf32>
    %10 = arith.truncf %9 : vector<8x128xf32> to vector<8x128xbf16>
    %c0_7 = arith.constant 0 : index
    %c0_8 = arith.constant 0 : index
    %11 = vector.load %arg5[%c0_7, %c0_8] : memref<8x128xbf16, #tpu.memory_space<vmem>>, vector<8x128xbf16>
    tpu.vector_store %arg5[%c0_7, %c0_8], %10 {strides = array<i32>} : memref<8x128xbf16, #tpu.memory_space<vmem>>, vector<8x128xbf16>,
    return
  }
  func.func @transform_0(%arg0: i32) -> (i32, i32) {
    %c0_i32 = arith.constant 0 : i32
    %c0_i32_0 = arith.constant 0 : i32
    return %arg0, %c0_i32 : i32, i32
  }
  func.func @transform_1(%arg0: i32) -> (i32, i32) {
    %c0_i32 = arith.constant 0 : i32
    %c0_i32_0 = arith.constant 0 : i32
    %c0_i32_1 = arith.constant 0 : i32
    return %c0_i32, %c0_i32_0 : i32, i32
  }
  func.func @transform_2(%arg0: i32) -> (i32, i32) {
    %c0_i32 = arith.constant 0 : i32
    %c0_i32_0 = arith.constant 0 : i32
    return %arg0, %c0_i32 : i32, i32
  }
  func.func @transform_3(%arg0: i32) -> (i32, i32) {
    %c0_i32 = arith.constant 0 : i32
    %c0_i32_0 = arith.constant 0 : i32
    return %arg0, %c0_i32 : i32, i32
  }
  func.func @transform_4(%arg0: i32) -> (i32, i32) {
    %c0_i32 = arith.constant 0 : i32
    %c0_i32_0 = arith.constant 0 : i32
    return %arg0, %c0_i32 : i32, i32
  }
}

</mosaic_0001>

<llo_original>
// kernel: tpu_custom_call.1
$region0: #{tpu_custom_call.1}
  #allocation0 [shape = 'u32[]', space=smem, size = 0x4, offset = 0x4, fixed_abs, tag = 'smem constant byte address 0x4 - core index']
  #allocation1 [shape = 'u32[72,128]{1,0:T(1,128)}', space=vmem, size = 0x9000, scoped, tag = 'internal scratch']
  %s0 = inlined_call_operand.hbm [shape: bf16[8,32], index: 0, kind: input, shape index: {}]
  %s1 = inlined_call_operand.hbm [shape: bf16[32,384], index: 1, kind: input, shape index: {}]
  %s2 = inlined_call_operand.hbm [shape: bf16[8,128], index: 2, kind: output, shape index: {0}]
  %s3 = inlined_call_operand.hbm [shape: bf16[8,128], index: 3, kind: output, shape index: {1}]
  %s4 = inlined_call_operand.hbm [shape: bf16[8,128], index: 4, kind: output, shape index: {2}]
  %5 = xla_tuple %s2, %s3, %s4
  %s6 = sld [smem:[#allocation0]]
  $region42: #{tpu_custom_call.1} parent=0
    _
  %s8 = ssub.s32 1, %s6
  %s9 = scalar_select 0, %s8, %s6
  $region1: #{tpu_custom_call.1} parent=0
    #allocation2 [shape = 'u8[2048]{0}', space=vmem, size = 0x800, scoped, tag = 'input window, operand 0, single buffered']
    #allocation3 [shape = 's32[1]{0}', space=sflag, size = 0x4, scoped, tag = 'scoped memory for tpu_custom_call.1']
    #allocation4 [shape = 's32[1]{0}', space=sflag, size = 0x4, scoped, tag = 'scoped memory for tpu_custom_call.1']
    #allocation5 [shape = 'u8[24576]{0}', space=vmem, size = 0x6000, scoped, tag = 'input window, operand 1, single buffered']
    #allocation6 [shape = 's32[1]{0}', space=sflag, size = 0x4, scoped, tag = 'scoped memory for tpu_custom_call.1']
    #allocation7 [shape = 'u8[2048]{0}', space=vmem, size = 0x800, scoped, tag = 'output window, operand 0, single buffered']
    #allocation8 [shape = 'u8[2048]{0}', space=vmem, size = 0x800, scoped, tag = 'output window, operand 1, single buffered']
    #allocation9 [shape = 's32[1]{0}', space=sflag, size = 0x4, scoped, tag = 'scoped memory for tpu_custom_call.1']
    #allocation10 [shape = 'u8[2048]{0}', space=vmem, size = 0x800, scoped, tag = 'output window, operand 2, single buffered']
    %10 = vsyncpa [#allocation3], 0
    %11 = vsyncpa [#allocation6], 0
    %12 = vsyncpa [#allocation4], 0
    %13 = vsyncpa [#allocation9], 0
    // Predicated region
    $region2: #{tpu_custom_call.1} parent=1 // pred_check
      _
    $region3: #{tpu_custom_call.1} parent=1 // pred_check_branch
      %15 = sbr.rel (0) target = $region5
    $region4: #{tpu_custom_call.1} parent=1 // pred_region
      %17 = vsyncadd [#allocation3], 0
      %s19 = sshll.u32 %s0, 4
      %s20 = int_to_ptr.hbm [resolvable:$true] %s19
      %s21 = sshll.u32 [#allocation2], 4
      %s22 = int_to_ptr.vmem [resolvable:$true] %s21
      %24 = dma.hbm_to_vmem [thread:$0]  %s20, 64, %s22, [#allocation3]
    $region5: #{tpu_custom_call.1} parent=1 // pred_fallthru
      _
    // Predicated region
    $region6: #{tpu_custom_call.1} parent=1 // pred_check
      _
    $region7: #{tpu_custom_call.1} parent=1 // pred_check_branch
      %26 = sbr.rel (0) target = $region9
    $region8: #{tpu_custom_call.1} parent=1 // pred_region
      %28 = vsyncadd [#allocation6], 0
      %s29 = sshll.u32 %s1, 4
      %s30 = int_to_ptr.hbm [resolvable:$true] %s29
      %s31 = sshll.u32 [#allocation5], 4
      %s32 = int_to_ptr.vmem [resolvable:$true] %s31
      %37 = dma.hbm_to_vmem [thread:$0]  %s30, 768, %s32, [#allocation6], 192, 192, 12
    $region9: #{tpu_custom_call.1} parent=1 // pred_fallthru
      _
    // Predicated region
    $region10: #{tpu_custom_call.1} parent=1 // pred_check
      _
    $region11: #{tpu_custom_call.1} parent=1 // pred_check_branch
      %39 = sbr.rel (0) target = $region13
    $region12: #{tpu_custom_call.1} parent=1 // pred_region
      %41 = dma.done [#allocation3], 64
    $region13: #{tpu_custom_call.1} parent=1 // pred_fallthru
      _
    // Predicated region
    $region14: #{tpu_custom_call.1} parent=1 // pred_check
      _
    $region15: #{tpu_custom_call.1} parent=1 // pred_check_branch
      %43 = sbr.rel (0) target = $region17
    $region16: #{tpu_custom_call.1} parent=1 // pred_region
      %45 = dma.done [#allocation6], 768
    $region17: #{tpu_custom_call.1} parent=1 // pred_fallthru
      _
    %v47 = vld [vmem:[#allocation2] sm:$0xf]
    %v48 = vld [vmem:[#allocation5] sm:$0xff]
    %v49 = vld [vmem:[#allocation5 + $0x8] sm:$0xf]
    %v50 = vld [vmem:[#allocation5 + $0xc] sm:$0xff]
    %v51 = vld [vmem:[#allocation5 + $0x14] sm:$0xf]
    %v52 = vld [vmem:[#allocation5 + $0x18] sm:$0xff]
    %v53 = vld [vmem:[#allocation5 + $0x20] sm:$0xf]
    %v54 = vld [vmem:[#allocation5 + $0x24] sm:$0xff]
    %v55 = vld [vmem:[#allocation5 + $0x2c] sm:$0xf]
    %v64 = vunpack.c.l.b16 %v48
    %v65 = vunpack.c.h.b16 %v48
    %v66 = vunpack.c.l.b16 %v49
    %v67 = vunpack.c.l.b16 %v50
    %v68 = vunpack.c.h.b16 %v50
    %v69 = vunpack.c.l.b16 %v51
    %v70 = vunpack.c.l.b16 %v52
    %v71 = vunpack.c.h.b16 %v52
    %v72 = vunpack.c.l.b16 %v53
    %v73 = vunpack.c.l.b16 %v54
    %v74 = vunpack.c.h.b16 %v54
    %v75 = vunpack.c.l.b16 %v55
    %v76 = vpack.c.b16 %v67, %v64
    %v77 = vpack.c.b16 %v68, %v65
    %v78 = vpack.c.b16 %v69, %v66
    %v79 = vpack.c.b16 %v73, %v70
    %v80 = vpack.c.b16 %v74, %v71
    %v81 = vpack.c.b16 %v75, %v72
    %vm88 = vcmask 261120
    %v90 = vsel %vm88, %v47, 0
    %92 = vmatpush.bf16.msra.mxu0 0
    %93 = vmatpush.bf16.msra.mxu0 0
    %94 = vmatpush.bf16.msra.mxu0 0
    %95 = vmatpush.bf16.msra.mxu0 0
    %96 = vmatpush.bf16.msra.mxu0 0
    %97 = vmatpush.bf16.msra.mxu0 0
    %98 = vmatpush.bf16.msra.mxu0 %v79
    %99 = vmatpush.bf16.msra.mxu0 %v76
    %100 = vmatmul.bf16.gmra.mxu0 %v90
    %v101 = vpop.f32.mrf.mxu0
    %v102 = vadd.f32 0.0, %v101
    %v103 = vpop.f32.mrf.mxu0
    %104 = vdwg.mxu0
    %105 = vmatpush.bf16.msra.mxu0 0
    %106 = vmatpush.bf16.msra.mxu0 0
    %107 = vmatpush.bf16.msra.mxu0 0
    %108 = vmatpush.bf16.msra.mxu0 0
    %109 = vmatpush.bf16.msra.mxu0 0
    %110 = vmatpush.bf16.msra.mxu0 0
    %111 = vmatpush.bf16.msra.mxu0 %v80
    %112 = vmatpush.bf16.msra.mxu0 %v77
    %113 = vmatmul.bf16.gmra.mxu0 %v90
    %v114 = vpop.f32.mrf.mxu0
    %v115 = vadd.f32 0.0, %v114
    %v116 = vpop.f32.mrf.mxu0
    %117 = vdwg.mxu0
    %118 = vmatpush.bf16.msra.mxu0 0
    %119 = vmatpush.bf16.msra.mxu0 0
    %120 = vmatpush.bf16.msra.mxu0 0
    %121 = vmatpush.bf16.msra.mxu0 0
    %122 = vmatpush.bf16.msra.mxu0 0
    %123 = vmatpush.bf16.msra.mxu0 0
    %124 = vmatpush.bf16.msra.mxu0 %v81
    %125 = vmatpush.bf16.msra.mxu0 %v78
    %126 = vmatmul.bf16.gmra.mxu0 %v90
    %v127 = vpop.f32.mrf.mxu0
    %v128 = vadd.f32 0.0, %v127
    %v129 = vpop.f32.mrf.mxu0
    %130 = vdwg.mxu0
    %v131 = vpack.c.bf16 %v102, %v102
    %132 = vst [vmem:[#allocation7] sm:$0xf] %v131
    %v133 = vpack.c.bf16 %v115, %v115
    %134 = vst [vmem:[#allocation8] sm:$0xf] %v133
    %v135 = vpack.c.bf16 %v128, %v128
    %136 = vst [vmem:[#allocation10] sm:$0xf] %v135
    // Predicated region
    $region18: #{tpu_custom_call.1} parent=1 // pred_check
      _
    $region19: #{tpu_custom_call.1} parent=1 // pred_check_branch
      %138 = sbr.rel (0) target = $region21
    $region20: #{tpu_custom_call.1} parent=1 // pred_region
      %140 = vsyncadd [#allocation4], 0
      %s142 = sshll.u32 [#allocation7], 4
      %s143 = int_to_ptr.vmem [resolvable:$true] %s142
      %s144 = sshll.u32 %s2, 4
      %s145 = int_to_ptr.hbm [resolvable:$true] %s144
      %147 = dma.vmem_to_hbm [thread:$0]  %s143, 64, %s145, [#allocation4]
    $region21: #{tpu_custom_call.1} parent=1 // pred_fallthru
      _
    // Predicated region
    $region22: #{tpu_custom_call.1} parent=1 // pred_check
      _
    $region23: #{tpu_custom_call.1} parent=1 // pred_check_branch
      %149 = sbr.rel (0) target = $region25
    $region24: #{tpu_custom_call.1} parent=1 // pred_region
      %151 = vsyncadd [#allocation9], 0
      %s153 = sshll.u32 [#allocation8], 4
      %s154 = int_to_ptr.vmem [resolvable:$true] %s153
      %s155 = sshll.u32 %s3, 4
      %s156 = int_to_ptr.hbm [resolvable:$true] %s155
      %158 = dma.vmem_to_hbm [thread:$0]  %s154, 64, %s156, [#allocation9]
    $region25: #{tpu_custom_call.1} parent=1 // pred_fallthru
      _
    // Predicated region
    $region26: #{tpu_custom_call.1} parent=1 // pred_check
      _
    $region27: #{tpu_custom_call.1} parent=1 // pred_check_branch
      %160 = sbr.rel (0) target = $region29
    $region28: #{tpu_custom_call.1} parent=1 // pred_region
      %162 = vsyncadd [#allocation9], 0
      %s164 = sshll.u32 [#allocation10], 4
      %s165 = int_to_ptr.vmem [resolvable:$true] %s164
      %s166 = sshll.u32 %s4, 4
      %s167 = int_to_ptr.hbm [resolvable:$true] %s166
      %169 = dma.vmem_to_hbm [thread:$0]  %s165, 64, %s167, [#allocation9]
    $region29: #{tpu_custom_call.1} parent=1 // pred_fallthru
      _
    // Predicated region
    $region30: #{tpu_custom_call.1} parent=1 // pred_check
      _
    $region31: #{tpu_custom_call.1} parent=1 // pred_check_branch
      %171 = sbr.rel (0) target = $region33
    $region32: #{tpu_custom_call.1} parent=1 // pred_region
      %173 = dma.done [#allocation4], 64
    $region33: #{tpu_custom_call.1} parent=1 // pred_fallthru
      _
    // Predicated region
    $region34: #{tpu_custom_call.1} parent=1 // pred_check
      _
    $region35: #{tpu_custom_call.1} parent=1 // pred_check_branch
      %175 = sbr.rel (0) target = $region37
    $region36: #{tpu_custom_call.1} parent=1 // pred_region
      %177 = dma.done [#allocation9], 64
    $region37: #{tpu_custom_call.1} parent=1 // pred_fallthru
      _
    // Predicated region
    $region38: #{tpu_custom_call.1} parent=1 // pred_check
      _
    $region39: #{tpu_custom_call.1} parent=1 // pred_check_branch
      %179 = sbr.rel (0) target = $region41
    $region40: #{tpu_custom_call.1} parent=1 // pred_region
      %181 = dma.done [#allocation9], 64
    $region41: #{tpu_custom_call.1} parent=1 // pred_fallthru
      _
    %182 = vsyncpa [#allocation3], 1
    %183 = vsyncpa [#allocation6], 1
    %184 = vsyncpa [#allocation4], 1
    %185 = vsyncpa [#allocation9], 1

</llo_original>
